<compile_context>
chip_gen: v7x
topology: tpu7x:2x2x1
jax: 0.10.0
libtpu: 0.0.40
codegen_flags: <defaults>
</compile_context>

<pallas_src>
import functools

import jax
import jax.numpy as jnp
from jax.experimental import pallas as pl
from jax.experimental.pallas import tpu as pltpu


def _senet_kernel(x_ref, w1t_ref, b1_ref, w2t_ref, b2_ref, o_ref, acc_ref, *, inv_hw):
    """x_ref: (N, C, S_BLK) spatial chunk; acc_ref: (N, C) f32 running pool sum."""
    s = pl.program_id(0)

    @pl.when(s == 0)
    def _():
        acc_ref[...] = jnp.zeros_like(acc_ref)

    # Partial global-average-pool: reduce this spatial chunk over the lane axis,
    # accumulating in f32 regardless of the input dtype.
    acc_ref[...] += jnp.sum(x_ref[...].astype(jnp.float32), axis=-1)

    @pl.when(s == pl.num_programs(0) - 1)
    def _():
        mean = acc_ref[...] * inv_hw                                       # (N, C)
        h = jnp.dot(mean, w1t_ref[...],
                    preferred_element_type=jnp.float32) + b1_ref[...]      # (N, hid)
        h = jnp.maximum(h, 0.0)                                            # ReLU
        y = jnp.dot(h, w2t_ref[...],
                    preferred_element_type=jnp.float32) + b2_ref[...]      # (N, C)
        o_ref[...] = jax.nn.sigmoid(y).astype(o_ref.dtype)                 # Sigmoid


def _choose_spatial_block(hw: int, rows: int, budget_bytes: int = 8 << 20) -> int:
    """Largest multiple-of-128 divisor of hw with rows*s*4B <= budget (else full hw)."""
    if hw % 128 != 0:
        # Single full-width block; correct (but unblocked) for awkward spatial sizes.
        return hw
    cap = max(128, (budget_bytes // (rows * 4)) // 128 * 128)
    s = min(cap, hw)
    while hw % s != 0:
        s -= 128
    return s


@functools.partial(jax.jit, static_argnames=("spatial_block",))
def senet_forward(x, w1, b1, w2, b2, *, spatial_block=None):
    """senet.forward: x (N, C, H, W) -> channel excitation (N, C, 1, 1).

    w1: (C//16, C), b1: (C//16,), w2: (C, C//16), b2: (C,)  (torch Linear layout).
    """
    N, C, H, W = x.shape
    hidden = w1.shape[0]
    HW = H * W
    if spatial_block is None:
        spatial_block = _choose_spatial_block(HW, N * C)
    assert HW % spatial_block == 0

    x3 = x.reshape(N, C, HW)
    # Pre-transpose weights on the host so the kernel does no in-kernel .T.
    w1t = jnp.transpose(w1)          # (C, hidden)
    w2t = jnp.transpose(w2)          # (hidden, C)
    b1r = b1.reshape(1, hidden)
    b2r = b2.reshape(1, C)

    kernel = functools.partial(_senet_kernel, inv_hw=1.0 / float(HW))

    y = pl.pallas_call(
        kernel,
        out_shape=jax.ShapeDtypeStruct((N, C), x.dtype),
        grid_spec=pltpu.PrefetchScalarGridSpec(
            num_scalar_prefetch=0,
            grid=(HW // spatial_block,),
            in_specs=[
                # Full (N, C) block per step, lane-dense spatial chunk.
                pl.BlockSpec((N, C, spatial_block), lambda s: (0, 0, s)),
                # Weights/biases: constant index_map -> stay resident in VMEM.
                pl.BlockSpec((C, hidden), lambda s: (0, 0)),
                pl.BlockSpec((1, hidden), lambda s: (0, 0)),
                pl.BlockSpec((hidden, C), lambda s: (0, 0)),
                pl.BlockSpec((1, C), lambda s: (0, 0)),
            ],
            out_specs=pl.BlockSpec((N, C), lambda s: (0, 0)),
            scratch_shapes=[pltpu.VMEM((N, C), jnp.float32)],
        ),
        compiler_params=pltpu.CompilerParams(
            dimension_semantics=("arbitrary",),   # spatial axis is a reduction
            vmem_limit_bytes=32 << 20,            # room for large double-buffered tiles
        ),
    )(x3, w1t, b1r, w2t, b2r)

    # torch: squeeze -> (N, C) (for N > 1), then unsqueeze(-1) twice -> (N, C, 1, 1).
    # TODO(synk): for N == 1 torch.squeeze also drops the batch dim ((C,1,1)); this
    # wrapper keeps the batch dim, matching the N > 1 behavior used here.
    return y.reshape(N, C, 1, 1)


def _reference_senet(x, w1, b1, w2, b2):
    """Pure-JAX reference of senet.forward."""
    glb = jnp.mean(x, axis=(2, 3))                        # adaptive_avg_pool2d + squeeze
    h = jnp.maximum(glb @ w1.T + b1, 0.0)                 # line1 + ReLU
    y = jax.nn.sigmoid(h @ w2.T + b2)                     # line2 + Sigmoid
    return y[:, :, None, None]                            # unsqueeze(-1) x2


if __name__ == "__main__":
    key = jax.random.PRNGKey(0)
    # in_channels must be >= 16 so int(in_channels // 16) >= 1 (Linear out dim).
    N, C, H, W = 2, 64, 16, 16
    hidden = C // 16

    kx, k1, k2, k3, k4 = jax.random.split(key, 5)
    x = jax.random.normal(kx, (N, C, H, W), dtype=jnp.float32)
    # nn.Linear parameters stored as (out_features, in_features), like torch.
    w1 = jax.random.normal(k1, (hidden, C), dtype=jnp.float32) * (1.0 / jnp.sqrt(C))
    b1 = jax.random.normal(k2, (hidden,), dtype=jnp.float32) * 0.1
    w2 = jax.random.normal(k3, (C, hidden), dtype=jnp.float32) * (1.0 / jnp.sqrt(hidden))
    b2 = jax.random.normal(k4, (C,), dtype=jnp.float32) * 0.1

    # spatial_block=128 -> grid of 2 steps, exercising the accumulation path.
    out = senet_forward(x, w1, b1, w2, b2, spatial_block=128)
    jax.block_until_ready(out)

    ref = _reference_senet(x, w1, b1, w2, b2)
    assert out.shape == (N, C, 1, 1)
    assert jnp.allclose(out, ref, atol=1e-5, rtol=1e-5), float(jnp.max(jnp.abs(out - ref)))

    # Also exercise the auto-chosen (single-step) block path.
    out2 = senet_forward(x, w1, b1, w2, b2)
    jax.block_until_ready(out2)
    assert jnp.allclose(out2, ref, atol=1e-5, rtol=1e-5), float(jnp.max(jnp.abs(out2 - ref)))

    print("KERNEL_OK")
</pallas_src>

<mosaic_0001>
module attributes {stable_mosaic.version = 11 : i64} {
  func.func @_senet_kernel(%arg0: i32, %arg1: memref<2x64x128xf32, #tpu.memory_space<vmem>>, %arg2: memref<64x4xf32, #tpu.memory_space<vmem>>, %arg3: memref<1x4xf32, #tpu.memory_space<vmem>>, %arg4: memref<4x64xf32, #tpu.memory_space<vmem>>, %arg5: memref<1x64xf32, #tpu.memory_space<vmem>>, %arg6: memref<2x64xf32, #tpu.memory_space<vmem>>, %arg7: memref<2x64xf32, #tpu.memory_space<vmem>>) attributes {dimension_semantics = [#tpu.dimension_semantics<arbitrary>], iteration_bounds = array<i64: 2>, scalar_prefetch = 0 : i64, scratch_operands = 1 : i64, tpu.core_type = #tpu.core_type<tc>, window_params = [{transform_indices = @transform_0, window_bounds = array<i64: 2, 64, 128>}, {pipeline_mode = #tpu.pipeline_mode<synchronous>, transform_indices = @transform_1, window_bounds = array<i64: 64, 4>}, {pipeline_mode = #tpu.pipeline_mode<synchronous>, transform_indices = @transform_2, window_bounds = array<i64: 1, 4>}, {pipeline_mode = #tpu.pipeline_mode<synchronous>, transform_indices = @transform_3, window_bounds = array<i64: 4, 64>}, {pipeline_mode = #tpu.pipeline_mode<synchronous>, transform_indices = @transform_4, window_bounds = array<i64: 1, 64>}, {pipeline_mode = #tpu.pipeline_mode<synchronous>, transform_indices = @transform_5, window_bounds = array<i64: 2, 64>}]} {
    %c0_i32 = arith.constant 0 : i32
    %0 = arith.cmpi eq, %arg0, %c0_i32 : i32
    %1 = arith.extui %0 : i1 to i32
    %c0_i32_0 = arith.constant 0 : i32
    %2 = arith.cmpi ne, %1, %c0_i32_0 : i32
    scf.if %2 {
      %cst_8 = arith.constant 0.000000e+00 : f32
      %11 = vector.broadcast %cst_8 : f32 to vector<2x64xf32>
      %c0_9 = arith.constant 0 : index
      %c0_10 = arith.constant 0 : index
      %12 = vector.load %arg7[%c0_9, %c0_10] : memref<2x64xf32, #tpu.memory_space<vmem>>, vector<2x64xf32>
      tpu.vector_store %arg7[%c0_9, %c0_10], %11 {strides = array<i32>} : memref<2x64xf32, #tpu.memory_space<vmem>>, vector<2x64xf32>,
    } else {
    }
    %c0 = arith.constant 0 : index
    %c0_1 = arith.constant 0 : index
    %3 = vector.load %arg7[%c0, %c0_1] : memref<2x64xf32, #tpu.memory_space<vmem>>, vector<2x64xf32>
    %c0_2 = arith.constant 0 : index
    %c0_3 = arith.constant 0 : index
    %c0_4 = arith.constant 0 : index
    %4 = vector.load %arg1[%c0_2, %c0_3, %c0_4] : memref<2x64x128xf32, #tpu.memory_space<vmem>>, vector<2x64x128xf32>
    %cst = arith.constant dense<0.000000e+00> : vector<2x64xf32>
    %5 = vector.multi_reduction <add>, %4, %cst [2] : vector<2x64x128xf32> to vector<2x64xf32>
    %6 = arith.addf %3, %5 : vector<2x64xf32>
    %c0_5 = arith.constant 0 : index
    %c0_6 = arith.constant 0 : index
    %7 = vector.load %arg7[%c0_5, %c0_6] : memref<2x64xf32, #tpu.memory_space<vmem>>, vector<2x64xf32>
    tpu.vector_store %arg7[%c0_5, %c0_6], %6 {strides = array<i32>} : memref<2x64xf32, #tpu.memory_space<vmem>>, vector<2x64xf32>,
    %c1_i32 = arith.constant 1 : i32
    %8 = arith.cmpi eq, %arg0, %c1_i32 : i32
    %9 = arith.extui %8 : i1 to i32
    %c0_i32_7 = arith.constant 0 : i32
    %10 = arith.cmpi ne, %9, %c0_i32_7 : i32
    scf.if %10 {
      %c0_8 = arith.constant 0 : index
      %c0_9 = arith.constant 0 : index
      %11 = vector.load %arg7[%c0_8, %c0_9] : memref<2x64xf32, #tpu.memory_space<vmem>>, vector<2x64xf32>
      %cst_10 = arith.constant 3.906250e-03 : f32
      %12 = vector.broadcast %cst_10 : f32 to vector<2x64xf32>
      %13 = arith.mulf %11, %12 : vector<2x64xf32>
      %c0_11 = arith.constant 0 : index
      %c0_12 = arith.constant 0 : index
      %14 = vector.load %arg2[%c0_11, %c0_12] : memref<64x4xf32, #tpu.memory_space<vmem>>, vector<64x4xf32>
      %cst_13 = arith.constant dense<0.000000e+00> : vector<2x4xf32>
      %15 = tpu.matmul %13, %14, %cst_13 {dimension_numbers = #tpu.dot_dimension_numbers<[1], [0], [0], [1], [0, 0, 1, 1], [], []>} : vector<2x64xf32>, vector<64x4xf32>, vector<2x4xf32> -> vector<2x4xf32>
      %c0_14 = arith.constant 0 : index
      %c0_15 = arith.constant 0 : index
      %16 = vector.load %arg3[%c0_14, %c0_15] : memref<1x4xf32, #tpu.memory_space<vmem>>, vector<1x4xf32>
      %17 = vector.broadcast %16 : vector<1x4xf32> to vector<2x4xf32>
      %18 = arith.addf %15, %17 : vector<2x4xf32>
      %cst_16 = arith.constant 0.000000e+00 : f32
      %19 = vector.broadcast %cst_16 : f32 to vector<2x4xf32>
      %20 = arith.maximumf %18, %19 : vector<2x4xf32>
      %c0_17 = arith.constant 0 : index
      %c0_18 = arith.constant 0 : index
      %21 = vector.load %arg4[%c0_17, %c0_18] : memref<4x64xf32, #tpu.memory_space<vmem>>, vector<4x64xf32>
      %cst_19 = arith.constant dense<0.000000e+00> : vector<2x64xf32>
      %22 = tpu.matmul %20, %21, %cst_19 {dimension_numbers = #tpu.dot_dimension_numbers<[1], [0], [0], [1], [0, 0, 1, 1], [], []>} : vector<2x4xf32>, vector<4x64xf32>, vector<2x64xf32> -> vector<2x64xf32>
      %c0_20 = arith.constant 0 : index
      %c0_21 = arith.constant 0 : index
      %23 = vector.load %arg5[%c0_20, %c0_21] : memref<1x64xf32, #tpu.memory_space<vmem>>, vector<1x64xf32>
      %24 = vector.broadcast %23 : vector<1x64xf32> to vector<2x64xf32>
      %25 = arith.addf %22, %24 : vector<2x64xf32>
      %26 = arith.negf %25 : vector<2x64xf32>
      %27 = math.exp %26 : vector<2x64xf32>
      %cst_22 = arith.constant 1.000000e+00 : f32
      %28 = vector.broadcast %cst_22 : f32 to vector<2x64xf32>
      %29 = arith.addf %28, %27 : vector<2x64xf32>
      %30 = arith.divf %28, %29 : vector<2x64xf32>
      %c0_23 = arith.constant 0 : index
      %c0_24 = arith.constant 0 : index
      %31 = vector.load %arg6[%c0_23, %c0_24] : memref<2x64xf32, #tpu.memory_space<vmem>>, vector<2x64xf32>
      tpu.vector_store %arg6[%c0_23, %c0_24], %30 {strides = array<i32>} : memref<2x64xf32, #tpu.memory_space<vmem>>, vector<2x64xf32>,
    } else {
    }
    return
  }
  func.func @transform_0(%arg0: i32) -> (i32, i32, i32) {
    %c0_i32 = arith.constant 0 : i32
    %c0_i32_0 = arith.constant 0 : i32
    %c0_i32_1 = arith.constant 0 : i32
    return %c0_i32, %c0_i32_0, %arg0 : i32, i32, i32
  }
  func.func @transform_1(%arg0: i32) -> (i32, i32) {
    %c0_i32 = arith.constant 0 : i32
    %c0_i32_0 = arith.constant 0 : i32
    %c0_i32_1 = arith.constant 0 : i32
    return %c0_i32, %c0_i32_0 : i32, i32
  }
  func.func @transform_2(%arg0: i32) -> (i32, i32) {
    %c0_i32 = arith.constant 0 : i32
    %c0_i32_0 = arith.constant 0 : i32
    %c0_i32_1 = arith.constant 0 : i32
    return %c0_i32, %c0_i32_0 : i32, i32
  }
  func.func @transform_3(%arg0: i32) -> (i32, i32) {
    %c0_i32 = arith.constant 0 : i32
    %c0_i32_0 = arith.constant 0 : i32
    %c0_i32_1 = arith.constant 0 : i32
    return %c0_i32, %c0_i32_0 : i32, i32
  }
  func.func @transform_4(%arg0: i32) -> (i32, i32) {
    %c0_i32 = arith.constant 0 : i32
    %c0_i32_0 = arith.constant 0 : i32
    %c0_i32_1 = arith.constant 0 : i32
    return %c0_i32, %c0_i32_0 : i32, i32
  }
  func.func @transform_5(%arg0: i32) -> (i32, i32) {
    %c0_i32 = arith.constant 0 : i32
    %c0_i32_0 = arith.constant 0 : i32
    %c0_i32_1 = arith.constant 0 : i32
    return %c0_i32, %c0_i32_0 : i32, i32
  }
}

</mosaic_0001>

<llo_original>
// kernel: senet_forward.1
$region0: #{senet_forward.1}
  #allocation0 [shape = 'u32[]', space=smem, size = 0x4, offset = 0x4, fixed_abs, tag = 'smem constant byte address 0x4 - core index']
  #allocation1 [shape = 'u32[144,128]{1,0:T(1,128)}', space=vmem, size = 0x12000, scoped, tag = 'internal scratch']
  #allocation2 [shape = 'f32[2,64]{1,0:T(2,128)}', space=vmem, size = 0x400, scoped, tag = 'scratch operand']
  %s0 = inlined_call_operand.vmem [shape: f32[2,64,256], index: 0, kind: input, shape index: {}]
  %s1 = inlined_call_operand.vmem [shape: f32[64,4], index: 1, kind: input, shape index: {}]
  %s2 = inlined_call_operand.vmem [shape: f32[1,4], index: 2, kind: input, shape index: {}]
  %s3 = inlined_call_operand.vmem [shape: f32[4,64], index: 3, kind: input, shape index: {}]
  %s4 = inlined_call_operand.vmem [shape: f32[1,64], index: 4, kind: input, shape index: {}]
  %s5 = inlined_call_operand.hbm [shape: f32[2,64], index: 5, kind: output, shape index: {}]
  %s6 = sld [smem:[#allocation0]]
  $region99: #{senet_forward.1} parent=0
    _
  %s8 = ssub.s32 1, %s6
  %s9 = scalar_select 0, %s8, %s6
  $region1: #{senet_forward.1} parent=0
    #allocation3 [shape = 'u8[131072]{0}', space=vmem, size = 0x20000, scoped, tag = 'input window, operand 0']
    #allocation4 [shape = 'u8[1024]{0}', space=vmem, size = 0x400, scoped, tag = 'output window, operand 0, single buffered']
    #allocation5 [shape = 's32[2]{0}', space=sflag, size = 0x8, scoped, tag = 'scoped memory for senet_forward.1']
    %10 = vsyncpa [#allocation5], 0
    loop: start=0, step=1, limit=4
    $region2: #{senet_forward.1} parent=1 // loop_pre_header
      _
    $region3: #{senet_forward.1} parent=1 // loop_header
      %s12 = sphi 0, %s16
      %p13 = scmp.ge.s32.totalorder %s12, 4
      %s22 = sphi 0, %s24
      %s25 = sphi 0, %s22
      %s26 = sphi 0, %s25
      %s42 = sphi 0, %s26
      %s46 = sphi 0, %s46
      %s48 = sphi 0, %s46
      %s49 = sphi 0, %s48
      %s63 = sphi 0, %s49
      %s67 = sphi 0, %s67
      %s69 = sphi 0, %s67
      %s70 = sphi 0, %s69
      %s84 = sphi 0, %s70
      %s88 = sphi 0, %s88
      %s90 = sphi 0, %s88
      %s91 = sphi 0, %s90
      %s105 = sphi 0, %s91
      %s109 = sphi 0, %s109
      %s111 = sphi 0, %s109
      %s112 = sphi 0, %s111
      %s126 = sphi 0, %s112
      %s130 = sphi 0, %s130
      %s132 = sphi 0, %s130
      %s133 = sphi 0, %s132
      %s147 = sphi 0, %s133
    $region4: #{senet_forward.1} parent=1 // loop_header_branch
      %15 = sbr.rel (%p13) target = $region8
    $region5: #{senet_forward.1} parent=1 // loop_body
      %s17 = ssub.s32 %s12, 1
      %s18 = ssub.s32 %s12, 2
      %s19 = sadd.s32 %s12, 1
      %s20 = ssub.s32 %s12, %s19
      %p21 = scmp.eq.s32.totalorder %s20, 0
      %s23 = sadd.s32 %s22, 1
      %s24 = scalar_select %p21, %s22, %s23
      %p27 = pneg %p21
      %p28 = scmp.eq.s32.totalorder %s12, 1
      %p29 = por %p27, %p28
      %p30 = scmp.ne.s32.totalorder %s22, %s25
      %p31 = scmp.eq.s32.totalorder %s12, 0
      %p32 = por %p30, %p31
      %p33 = scmp.ne.s32.totalorder %s22, %s25
      %p34 = scmp.eq.s32.totalorder %s17, 1
      %p35 = por %p33, %p34
      %p36 = scmp.ne.s32.totalorder %s25, %s26
      %p37 = scmp.eq.s32.totalorder %s17, 0
      %p38 = por %p36, %p37
      %p39 = scmp.ne.s32.totalorder %s25, %s26
      %p40 = scmp.eq.s32.totalorder %s18, 1
      %p41 = por %p39, %p40
      %p43 = scmp.ne.s32.totalorder %s26, %s42
      %p44 = scmp.eq.s32.totalorder %s18, 0
      %p45 = por %p43, %p44
      %s47 = sadd.s32 %s46, 1
      %p50 = scmp.eq.s32.totalorder %s12, 1
      %p51 = scmp.ne.s32.totalorder %s46, %s48
      %p52 = scmp.eq.s32.totalorder %s12, 0
      %p53 = por %p51, %p52
      %p54 = scmp.ne.s32.totalorder %s46, %s48
      %p55 = scmp.eq.s32.totalorder %s17, 1
      %p56 = por %p54, %p55
      %p57 = scmp.ne.s32.totalorder %s48, %s49
      %p58 = scmp.eq.s32.totalorder %s17, 0
      %p59 = por %p57, %p58
      %p60 = scmp.ne.s32.totalorder %s48, %s49
      %p61 = scmp.eq.s32.totalorder %s18, 1
      %p62 = por %p60, %p61
      %p64 = scmp.ne.s32.totalorder %s49, %s63
      %p65 = scmp.eq.s32.totalorder %s18, 0
      %p66 = por %p64, %p65
      %s68 = sadd.s32 %s67, 1
      %p71 = scmp.eq.s32.totalorder %s12, 1
      %p72 = scmp.ne.s32.totalorder %s67, %s69
      %p73 = scmp.eq.s32.totalorder %s12, 0
      %p74 = por %p72, %p73
      %p75 = scmp.ne.s32.totalorder %s67, %s69
      %p76 = scmp.eq.s32.totalorder %s17, 1
      %p77 = por %p75, %p76
      %p78 = scmp.ne.s32.totalorder %s69, %s70
      %p79 = scmp.eq.s32.totalorder %s17, 0
      %p80 = por %p78, %p79
      %p81 = scmp.ne.s32.totalorder %s69, %s70
      %p82 = scmp.eq.s32.totalorder %s18, 1
      %p83 = por %p81, %p82
      %p85 = scmp.ne.s32.totalorder %s70, %s84
      %p86 = scmp.eq.s32.totalorder %s18, 0
      %p87 = por %p85, %p86
      %s89 = sadd.s32 %s88, 1
      %p92 = scmp.eq.s32.totalorder %s12, 1
      %p93 = scmp.ne.s32.totalorder %s88, %s90
      %p94 = scmp.eq.s32.totalorder %s12, 0
      %p95 = por %p93, %p94
      %p96 = scmp.ne.s32.totalorder %s88, %s90
      %p97 = scmp.eq.s32.totalorder %s17, 1
      %p98 = por %p96, %p97
      %p99 = scmp.ne.s32.totalorder %s90, %s91
      %p100 = scmp.eq.s32.totalorder %s17, 0
      %p101 = por %p99, %p100
      %p102 = scmp.ne.s32.totalorder %s90, %s91
      %p103 = scmp.eq.s32.totalorder %s18, 1
      %p104 = por %p102, %p103
      %p106 = scmp.ne.s32.totalorder %s91, %s105
      %p107 = scmp.eq.s32.totalorder %s18, 0
      %p108 = por %p106, %p107
      %s110 = sadd.s32 %s109, 1
      %p113 = scmp.eq.s32.totalorder %s12, 1
      %p114 = scmp.ne.s32.totalorder %s109, %s111
      %p115 = scmp.eq.s32.totalorder %s12, 0
      %p116 = por %p114, %p115
      %p117 = scmp.ne.s32.totalorder %s109, %s111
      %p118 = scmp.eq.s32.totalorder %s17, 1
      %p119 = por %p117, %p118
      %p120 = scmp.ne.s32.totalorder %s111, %s112
      %p121 = scmp.eq.s32.totalorder %s17, 0
      %p122 = por %p120, %p121
      %p123 = scmp.ne.s32.totalorder %s111, %s112
      %p124 = scmp.eq.s32.totalorder %s18, 1
      %p125 = por %p123, %p124
      %p127 = scmp.ne.s32.totalorder %s112, %s126
      %p128 = scmp.eq.s32.totalorder %s18, 0
      %p129 = por %p127, %p128
      %s131 = sadd.s32 %s130, 1
      %p134 = scmp.eq.s32.totalorder %s12, 1
      %p135 = scmp.ne.s32.totalorder %s130, %s132
      %p136 = scmp.eq.s32.totalorder %s12, 0
      %p137 = por %p135, %p136
      %p138 = scmp.ne.s32.totalorder %s130, %s132
      %p139 = scmp.eq.s32.totalorder %s17, 1
      %p140 = por %p138, %p139
      %p141 = scmp.ne.s32.totalorder %s132, %s133
      %p142 = scmp.eq.s32.totalorder %s17, 0
      %p143 = por %p141, %p142
      %p144 = scmp.ne.s32.totalorder %s132, %s133
      %p145 = scmp.eq.s32.totalorder %s18, 1
      %p146 = por %p144, %p145
      %p148 = scmp.ne.s32.totalorder %s133, %s147
      %p149 = scmp.eq.s32.totalorder %s18, 0
      %p150 = por %p148, %p149
      %p151 = scmp.le.s32.totalorder 1, %s12
      %p152 = scmp.lt.s32.totalorder %s12, 3
      %p153 = pnand %p151, %p152
      %p154 = pneg %p153
      // Predicated region
      $region9: #{senet_forward.1} parent=5 // pred_check
        _
      $region10: #{senet_forward.1} parent=5 // pred_check_branch
        %156 = sbr.rel (%p153) target = $region12
      $region11: #{senet_forward.1} parent=5 // pred_region
        %s157 = ssub.s32 %s12, 1
        // Predicated region
        $region13: #{senet_forward.1} parent=11 // pred_check
          %p158 = pneg %p59
        $region14: #{senet_forward.1} parent=11 // pred_check_branch
          %160 = sbr.rel (%p158) target = $region16
        $region15: #{senet_forward.1} parent=11 // pred_region
          _
        $region16: #{senet_forward.1} parent=11 // pred_fallthru
          _
        // Predicated region
        $region17: #{senet_forward.1} parent=11 // pred_check
          %p161 = pneg %p80
        $region18: #{senet_forward.1} parent=11 // pred_check_branch
          %163 = sbr.rel (%p161) target = $region20
        $region19: #{senet_forward.1} parent=11 // pred_region
          _
        $region20: #{senet_forward.1} parent=11 // pred_fallthru
          _
        // Predicated region
        $region21: #{senet_forward.1} parent=11 // pred_check
          %p164 = pneg %p101
        $region22: #{senet_forward.1} parent=11 // pred_check_branch
          %166 = sbr.rel (%p164) target = $region24
        $region23: #{senet_forward.1} parent=11 // pred_region
          _
        $region24: #{senet_forward.1} parent=11 // pred_fallthru
          _
        // Predicated region
        $region25: #{senet_forward.1} parent=11 // pred_check
          %p167 = pneg %p122
        $region26: #{senet_forward.1} parent=11 // pred_check_branch
          %169 = sbr.rel (%p167) target = $region28
        $region27: #{senet_forward.1} parent=11 // pred_region
          _
        $region28: #{senet_forward.1} parent=11 // pred_fallthru
          _
      $region12: #{senet_forward.1} parent=5 // pred_fallthru
        _
      %p170 = scmp.lt.s32.totalorder %s12, 2
      // Predicated region
      $region29: #{senet_forward.1} parent=5 // pred_check
        %p171 = pneg %p170
      $region30: #{senet_forward.1} parent=5 // pred_check_branch
        %173 = sbr.rel (%p171) target = $region32
      $region31: #{senet_forward.1} parent=5 // pred_region
        // Predicated region
        $region33: #{senet_forward.1} parent=31 // pred_check
          %p174 = pneg %p32
        $region34: #{senet_forward.1} parent=31 // pred_check_branch
          %176 = sbr.rel (%p174) target = $region36
        $region35: #{senet_forward.1} parent=31 // pred_region
          %s177 = sand.u32 %s22, 1
          %s178 = sand.u32 %s22, 1
          %s179 = smul.addr %s178, 128
          %s180 = scalar_lea.vmem [#allocation3], %s179
          %s181 = smul.addr %s12, 8
          %s182 = scalar_lea.vmem %s0, %s181
          // Predicated region
          $region37: #{senet_forward.1} parent=35 // pred_check
            _
          $region38: #{senet_forward.1} parent=35 // pred_check_branch
            %184 = sbr.rel (0) target = $region40
          $region39: #{senet_forward.1} parent=35 // pred_region
            // Predicated region
            $region41: #{senet_forward.1} parent=39 // pred_check
              _
            $region42: #{senet_forward.1} parent=39 // pred_check_branch
              %186 = sbr.rel (0) target = $region44
            $region43: #{senet_forward.1} parent=39 // pred_region
              // Predicated region
              $region56: #{senet_forward.1} parent=43 // pred_check
                _
              $region57: #{senet_forward.1} parent=43 // pred_check_branch
                %231 = sbr.rel (0) target = $region59
              $region58: #{senet_forward.1} parent=43 // pred_region
                loop: start=0, step=1, limit=1
                $region60: #{senet_forward.1} parent=58 // loop_pre_header
                  _
                $region61: #{senet_forward.1} parent=58 // loop_header
                  %s233 = sphi 0, %s237
                  %p234 = scmp.ge.s32.totalorder %s233, 1
                  %s238 = sphi %s182, %s182
                  %s239 = sphi %s180, %s180
                $region62: #{senet_forward.1} parent=58 // loop_header_branch
                  %236 = sbr.rel (%p234) target = $region66
                $region63: #{senet_forward.1} parent=58 // loop_body
                  %v240 = vld [vmem:[%s238] sm:$0xff]
                  %241 = vst [vmem:[%s239] sm:$0xff] %v240
                  %v242 = vld [vmem:[%s238 + $0x10] sm:$0xff]
                  %243 = vst [vmem:[%s239 + $0x8] sm:$0xff] %v242
                  %v244 = vld [vmem:[%s238 + $0x20] sm:$0xff]
                  %245 = vst [vmem:[%s239 + $0x10] sm:$0xff] %v244
                  %v246 = vld [vmem:[%s238 + $0x30] sm:$0xff]
                  %247 = vst [vmem:[%s239 + $0x18] sm:$0xff] %v246
                  %v248 = vld [vmem:[%s238 + $0x40] sm:$0xff]
                  %249 = vst [vmem:[%s239 + $0x20] sm:$0xff] %v248
                  %v250 = vld [vmem:[%s238 + $0x50] sm:$0xff]
                  %251 = vst [vmem:[%s239 + $0x28] sm:$0xff] %v250
                  %v252 = vld [vmem:[%s238 + $0x60] sm:$0xff]
                  %253 = vst [vmem:[%s239 + $0x30] sm:$0xff] %v252
                  %v254 = vld [vmem:[%s238 + $0x70] sm:$0xff]
                  %255 = vst [vmem:[%s239 + $0x38] sm:$0xff] %v254
                  %v256 = vld [vmem:[%s238 + $0x80] sm:$0xff]
                  %257 = vst [vmem:[%s239 + $0x40] sm:$0xff] %v256
                  %v258 = vld [vmem:[%s238 + $0x90] sm:$0xff]
                  %259 = vst [vmem:[%s239 + $0x48] sm:$0xff] %v258
                  %v260 = vld [vmem:[%s238 + $0xa0] sm:$0xff]
                  %261 = vst [vmem:[%s239 + $0x50] sm:$0xff] %v260
                  %v262 = vld [vmem:[%s238 + $0xb0] sm:$0xff]
                  %263 = vst [vmem:[%s239 + $0x58] sm:$0xff] %v262
                  %v264 = vld [vmem:[%s238 + $0xc0] sm:$0xff]
                  %265 = vst [vmem:[%s239 + $0x60] sm:$0xff] %v264
                  %v266 = vld [vmem:[%s238 + $0xd0] sm:$0xff]
                  %267 = vst [vmem:[%s239 + $0x68] sm:$0xff] %v266
                  %v268 = vld [vmem:[%s238 + $0xe0] sm:$0xff]
                  %269 = vst [vmem:[%s239 + $0x70] sm:$0xff] %v268
                  %v270 = vld [vmem:[%s238 + $0xf0] sm:$0xff]
                  %271 = vst [vmem:[%s239 + $0x78] sm:$0xff] %v270
                $region64: #{senet_forward.1} parent=58 // loop_footer
                  %s237 = sadd.s32 1, %s233
                $region65: #{senet_forward.1} parent=58 // loop_footer_branch
                  %232 = sbr.rel target = $region61
                $region66: #{senet_forward.1} parent=58 // loop_exit
                  _
              $region59: #{senet_forward.1} parent=43 // pred_fallthru
                _
              // Predicated region
              $region67: #{senet_forward.1} parent=43 // pred_check
                _
              $region68: #{senet_forward.1} parent=43 // pred_check_branch
                %273 = sbr.rel target = $region70
              $region69: #{senet_forward.1} parent=43 // pred_region
                _
              $region70: #{senet_forward.1} parent=43 // pred_fallthru
                _
            $region44: #{senet_forward.1} parent=39 // pred_fallthru
              _
            // Predicated region
            $region45: #{senet_forward.1} parent=39 // pred_check
              _
            $region46: #{senet_forward.1} parent=39 // pred_check_branch
              %188 = sbr.rel target = $region48
            $region47: #{senet_forward.1} parent=39 // pred_region
              loop: start=0, step=1, limit=1
              $region49: #{senet_forward.1} parent=47 // loop_pre_header
                _
              $region50: #{senet_forward.1} parent=47 // loop_header
                %s191 = sphi 0, %s195
                %p192 = scmp.ge.s32.totalorder %s191, 1
                %s196 = sphi %s182, %s182
                %s197 = sphi %s180, %s180
              $region51: #{senet_forward.1} parent=47 // loop_header_branch
                %194 = sbr.rel (%p192) target = $region55
              $region52: #{senet_forward.1} parent=47 // loop_body
                %v198 = vld [vmem:[%s196] sm:$0xff]
                %199 = vst [vmem:[%s197] sm:$0xff] %v198
                %v200 = vld [vmem:[%s196 + $0x10] sm:$0xff]
                %201 = vst [vmem:[%s197 + $0x8] sm:$0xff] %v200
                %v202 = vld [vmem:[%s196 + $0x20] sm:$0xff]
                %203 = vst [vmem:[%s197 + $0x10] sm:$0xff] %v202
                %v204 = vld [vmem:[%s196 + $0x30] sm:$0xff]
                %205 = vst [vmem:[%s197 + $0x18] sm:$0xff] %v204
                %v206 = vld [vmem:[%s196 + $0x40] sm:$0xff]
                %207 = vst [vmem:[%s197 + $0x20] sm:$0xff] %v206
                %v208 = vld [vmem:[%s196 + $0x50] sm:$0xff]
                %209 = vst [vmem:[%s197 + $0x28] sm:$0xff] %v208
                %v210 = vld [vmem:[%s196 + $0x60] sm:$0xff]
                %211 = vst [vmem:[%s197 + $0x30] sm:$0xff] %v210
                %v212 = vld [vmem:[%s196 + $0x70] sm:$0xff]
                %213 = vst [vmem:[%s197 + $0x38] sm:$0xff] %v212
                %v214 = vld [vmem:[%s196 + $0x80] sm:$0xff]
                %215 = vst [vmem:[%s197 + $0x40] sm:$0xff] %v214
                %v216 = vld [vmem:[%s196 + $0x90] sm:$0xff]
                %217 = vst [vmem:[%s197 + $0x48] sm:$0xff] %v216
                %v218 = vld [vmem:[%s196 + $0xa0] sm:$0xff]
                %219 = vst [vmem:[%s197 + $0x50] sm:$0xff] %v218
                %v220 = vld [vmem:[%s196 + $0xb0] sm:$0xff]
                %221 = vst [vmem:[%s197 + $0x58] sm:$0xff] %v220
                %v222 = vld [vmem:[%s196 + $0xc0] sm:$0xff]
                %223 = vst [vmem:[%s197 + $0x60] sm:$0xff] %v222
                %v224 = vld [vmem:[%s196 + $0xd0] sm:$0xff]
                %225 = vst [vmem:[%s197 + $0x68] sm:$0xff] %v224
                %v226 = vld [vmem:[%s196 + $0xe0] sm:$0xff]
                %227 = vst [vmem:[%s197 + $0x70] sm:$0xff] %v226
                %v228 = vld [vmem:[%s196 + $0xf0] sm:$0xff]
                %229 = vst [vmem:[%s197 + $0x78] sm:$0xff] %v228
              $region53: #{senet_forward.1} parent=47 // loop_footer
                %s195 = sadd.s32 1, %s191
              $region54: #{senet_forward.1} parent=47 // loop_footer_branch
                %190 = sbr.rel target = $region50
              $region55: #{senet_forward.1} parent=47 // loop_exit
                _
            $region48: #{senet_forward.1} parent=39 // pred_fallthru
              _
          $region40: #{senet_forward.1} parent=35 // pred_fallthru
            _
          %274 = vnop
        $region36: #{senet_forward.1} parent=31 // pred_fallthru
          _
      $region32: #{senet_forward.1} parent=5 // pred_fallthru
        _
      %p275 = scmp.le.s32.totalorder 1, %s12
      %p276 = scmp.lt.s32.totalorder %s12, 3
      %p277 = pnand %p275, %p276
      %p278 = pneg %p277
      // Predicated region
      $region71: #{senet_forward.1} parent=5 // pred_check
        _
      $region72: #{senet_forward.1} parent=5 // pred_check_branch
        %280 = sbr.rel (%p277) target = $region74
      $region73: #{senet_forward.1} parent=5 // pred_region
        %s281 = ssub.s32 %s12, 1
        %s282 = sand.u32 %s25, 1
        %s283 = sand.u32 %s25, 1
        %s284 = smul.addr %s283, 128
        %s285 = scalar_lea.vmem [#allocation3], %s284
        // Predicated region
        $region75: #{senet_forward.1} parent=73 // pred_check
          %p286 = pneg %p38
        $region76: #{senet_forward.1} parent=73 // pred_check_branch
          %288 = sbr.rel (%p286) target = $region78
        $region77: #{senet_forward.1} parent=73 // pred_region
          _
        $region78: #{senet_forward.1} parent=73 // pred_fallthru
          _
        %s289 = sand.u32 %s25, 1
        %s290 = sand.u32 %s25, 1
        %s291 = smul.addr %s290, 128
        %s292 = scalar_lea.vmem [#allocation3], %s291
        %p293 = pneg %p38
        %p294 = pneg %p35
        %p295 = pneg %p59
        %p296 = pneg %p56
        %p297 = pneg %p80
        %p298 = pneg %p77
        %p299 = pneg %p101
        %p300 = pneg %p98
        %p301 = pneg %p122
        %p302 = pneg %p119
        %p303 = pneg %p143
        %p304 = pneg %p140
        %p305 = scmp.eq.s32.totalorder %s17, 0
        // Predicated region
        $region79: #{senet_forward.1} parent=73 // pred_check
          %p306 = pneg %p305
        $region80: #{senet_forward.1} parent=73 // pred_check_branch
          %308 = sbr.rel (%p306) target = $region82
        $region81: #{senet_forward.1} parent=73 // pred_region
          %vm309 = vcmask 517120
          %310 = vst.msk [vmem:[#allocation2] sm:$0x3] %vm309, 0.0
        $region82: #{senet_forward.1} parent=73 // pred_fallthru
          _
        %v311 = vld [vmem:[#allocation2] sm:$0x3]
        %v312 = vld [vmem:[%s285] sm:$0xff]
        %v313 = vld [vmem:[%s285 + $0x8] sm:$0xff]
        %v314 = vld [vmem:[%s285 + $0x10] sm:$0xff]
        %v315 = vld [vmem:[%s285 + $0x18] sm:$0xff]
        %v316 = vld [vmem:[%s285 + $0x20] sm:$0xff]
        %v317 = vld [vmem:[%s285 + $0x28] sm:$0xff]
        %v318 = vld [vmem:[%s285 + $0x30] sm:$0xff]
        %v319 = vld [vmem:[%s285 + $0x38] sm:$0xff]
        %v320 = vld [vmem:[%s285 + $0x40] sm:$0xff]
        %v321 = vld [vmem:[%s285 + $0x48] sm:$0xff]
        %v322 = vld [vmem:[%s285 + $0x50] sm:$0xff]
        %v323 = vld [vmem:[%s285 + $0x58] sm:$0xff]
        %v324 = vld [vmem:[%s285 + $0x60] sm:$0xff]
        %v325 = vld [vmem:[%s285 + $0x68] sm:$0xff]
        %v326 = vld [vmem:[%s285 + $0x70] sm:$0xff]
        %v327 = vld [vmem:[%s285 + $0x78] sm:$0xff]
        %328 = vadd.xlane.f32.xlu0 %v312
        %v329 = vpop.xlane.xlu0 %328
        %330 = vadd.xlane.f32.xlu0 %v313
        %v331 = vpop.xlane.xlu0 %330
        %332 = vadd.xlane.f32.xlu0 %v314
        %v333 = vpop.xlane.xlu0 %332
        %334 = vadd.xlane.f32.xlu0 %v315
        %v335 = vpop.xlane.xlu0 %334
        %336 = vadd.xlane.f32.xlu0 %v316
        %v337 = vpop.xlane.xlu0 %336
        %338 = vadd.xlane.f32.xlu0 %v317
        %v339 = vpop.xlane.xlu0 %338
        %340 = vadd.xlane.f32.xlu0 %v318
        %v341 = vpop.xlane.xlu0 %340
        %342 = vadd.xlane.f32.xlu0 %v319
        %v343 = vpop.xlane.xlu0 %342
        %344 = vadd.xlane.f32.xlu0 %v320
        %v345 = vpop.xlane.xlu0 %344
        %346 = vadd.xlane.f32.xlu0 %v321
        %v347 = vpop.xlane.xlu0 %346
        %348 = vadd.xlane.f32.xlu0 %v322
        %v349 = vpop.xlane.xlu0 %348
        %350 = vadd.xlane.f32.xlu0 %v323
        %v351 = vpop.xlane.xlu0 %350
        %352 = vadd.xlane.f32.xlu0 %v324
        %v353 = vpop.xlane.xlu0 %352
        %354 = vadd.xlane.f32.xlu0 %v325
        %v355 = vpop.xlane.xlu0 %354
        %356 = vadd.xlane.f32.xlu0 %v326
        %v357 = vpop.xlane.xlu0 %356
        %358 = vadd.xlane.f32.xlu0 %v327
        %v359 = vpop.xlane.xlu0 %358
        %v376 = vlaneseq
        %v377 = vand.u32 %v376, 127
        %v378 = vlaneseq
        %v379 = vshrl.u32 %v378, 7
        %v380 = vsub.s32 %v377, %v379
        %v381 = vrot.slane %v329, %v380
        %v382 = vadd.s32 %v377, 4294967288
        %v383 = vlaneseq
        %v384 = vshrl.u32 %v383, 7
        %v385 = vsub.s32 %v382, %v384
        %v386 = vrot.slane %v331, %v385
        %vm387 = vcmask 130112
        %v388 = vsel %vm387, %v386, %v381
        %v389 = vadd.s32 %v377, 4294967280
        %v390 = vlaneseq
        %v391 = vshrl.u32 %v390, 7
        %v392 = vsub.s32 %v389, %v391
        %v393 = vrot.slane %v333, %v392
        %vm394 = vcmask 195712
        %v395 = vsel %vm394, %v393, %v388
        %v396 = vadd.s32 %v377, 4294967272
        %v397 = vlaneseq
        %v398 = vshrl.u32 %v397, 7
        %v399 = vsub.s32 %v396, %v398
        %v400 = vrot.slane %v335, %v399
        %vm401 = vcmask 261312
        %v402 = vsel %vm401, %v400, %v395
        %v403 = vadd.s32 %v377, 4294967264
        %v404 = vlaneseq
        %v405 = vshrl.u32 %v404, 7
        %v406 = vsub.s32 %v403, %v405
        %v407 = vrot.slane %v337, %v406
        %vm408 = vcmask 326912
        %v409 = vsel %vm408, %v407, %v402
        %v410 = vadd.s32 %v377, 4294967256
        %v411 = vlaneseq
        %v412 = vshrl.u32 %v411, 7
        %v413 = vsub.s32 %v410, %v412
        %v414 = vrot.slane %v339, %v413
        %vm415 = vcmask 392512
        %v416 = vsel %vm415, %v414, %v409
        %v417 = vadd.s32 %v377, 4294967248
        %v418 = vlaneseq
        %v419 = vshrl.u32 %v418, 7
        %v420 = vsub.s32 %v417, %v419
        %v421 = vrot.slane %v341, %v420
        %vm422 = vcmask 458112
        %v423 = vsel %vm422, %v421, %v416
        %v424 = vadd.s32 %v377, 4294967240
        %v425 = vlaneseq
        %v426 = vshrl.u32 %v425, 7
        %v427 = vsub.s32 %v424, %v426
        %v428 = vrot.slane %v343, %v427
        %vm429 = vcmask 523712
        %v430 = vsel %vm429, %v428, %v423
        %v431 = vlaneseq
        %v432 = vshrl.u32 %v431, 7
        %v433 = vsub.s32 %v377, %v432
        %v434 = vrot.slane %v345, %v433
        %v435 = vlaneseq
        %v436 = vshrl.u32 %v435, 7
        %v437 = vsub.s32 %v382, %v436
        %v438 = vrot.slane %v347, %v437
        %v439 = vsel %vm387, %v438, %v434
        %v440 = vlaneseq
        %v441 = vshrl.u32 %v440, 7
        %v442 = vsub.s32 %v389, %v441
        %v443 = vrot.slane %v349, %v442
        %v444 = vsel %vm394, %v443, %v439
        %v445 = vlaneseq
        %v446 = vshrl.u32 %v445, 7
        %v447 = vsub.s32 %v396, %v446
        %v448 = vrot.slane %v351, %v447
        %v449 = vsel %vm401, %v448, %v444
        %v450 = vlaneseq
        %v451 = vshrl.u32 %v450, 7
        %v452 = vsub.s32 %v403, %v451
        %v453 = vrot.slane %v353, %v452
        %v454 = vsel %vm408, %v453, %v449
        %v455 = vlaneseq
        %v456 = vshrl.u32 %v455, 7
        %v457 = vsub.s32 %v410, %v456
        %v458 = vrot.slane %v355, %v457
        %v459 = vsel %vm415, %v458, %v454
        %v460 = vlaneseq
        %v461 = vshrl.u32 %v460, 7
        %v462 = vsub.s32 %v417, %v461
        %v463 = vrot.slane %v357, %v462
        %v464 = vsel %vm422, %v463, %v459
        %v465 = vlaneseq
        %v466 = vshrl.u32 %v465, 7
        %v467 = vsub.s32 %v424, %v466
        %v468 = vrot.slane %v359, %v467
        %v469 = vsel %vm429, %v468, %v464
        %vm470 = vcmask 1041409
        %v471 = vsel %vm470, %v469, %v430
        %v473 = vadd.f32 %v311, %v471
        %vm474 = vcmask 517120
        %475 = vst.msk [vmem:[#allocation2] sm:$0x3] %vm474, %v473
        %p476 = scmp.eq.s32.totalorder %s17, 1
        // Predicated region
        $region83: #{senet_forward.1} parent=73 // pred_check
          %p477 = pneg %p476
        $region84: #{senet_forward.1} parent=73 // pred_check_branch
          %479 = sbr.rel (%p477) target = $region86
        $region85: #{senet_forward.1} parent=73 // pred_region
          %v480 = vld [vmem:[#allocation2] sm:$0x3]
          %v481 = vmul.f32 %v480, 0.00390625
          %v482 = vld [vmem:[%s1] sm:$0xff]
          %v483 = vld [vmem:[%s1 + $0x8] sm:$0xff]
          %v484 = vld [vmem:[%s1 + $0x10] sm:$0xff]
          %v485 = vld [vmem:[%s1 + $0x18] sm:$0xff]
          %v486 = vld [vmem:[%s1 + $0x20] sm:$0xff]
          %v487 = vld [vmem:[%s1 + $0x28] sm:$0xff]
          %v488 = vld [vmem:[%s1 + $0x30] sm:$0xff]
          %v489 = vld [vmem:[%s1 + $0x38] sm:$0xff]
          %v490 = vld [vmem:[%s2] sm:$0x1]
          %v492 = vlaneseq
          %v493 = vshrl.u32 %v492, 7
          %v494 = vsub.s32 0, %v493
          %v495 = vrot.slane %v490, %v494
          %vm497 = vcmask 523264
          %v499 = vsel %vm497, %v481, 0
          %501 = vmatprep.subr.mxu0 0.0
          %502 = vmatpush1.msra.mxu0 %v482
          %503 = vmatprep.subr.mxu0 0.0
          %504 = vmatpush1.msra.mxu0 %v483
          %505 = vmatprep.subr.mxu0 0.0
          %506 = vmatpush1.msra.mxu0 %v484
          %507 = vmatprep.subr.mxu0 0.0
          %508 = vmatpush1.msra.mxu0 %v485
          %509 = vmatprep.subr.mxu0 0.0
          %510 = vmatpush1.msra.mxu0 %v486
          %511 = vmatprep.subr.mxu0 0.0
          %512 = vmatpush1.msra.mxu0 %v487
          %513 = vmatprep.subr.mxu0 0.0
          %514 = vmatpush1.msra.mxu0 %v488
          %515 = vmatprep.subr.mxu0 0.0
          %516 = vmatpush1.msra.mxu0 %v489
          %517 = vmatprep.subr.mxu0 0.0
          %518 = vmatpush1.msra.mxu0 0.0
          %519 = vmatprep.subr.mxu0 0.0
          %520 = vmatpush1.msra.mxu0 0.0
          %521 = vmatprep.subr.mxu0 0.0
          %522 = vmatpush1.msra.mxu0 0.0
          %523 = vmatprep.subr.mxu0 0.0
          %524 = vmatpush1.msra.mxu0 0.0
          %525 = vmatprep.subr.mxu0 0.0
          %526 = vmatpush1.msra.mxu0 0.0
          %527 = vmatprep.subr.mxu0 0.0
          %528 = vmatpush1.msra.mxu0 0.0
          %529 = vmatprep.subr.mxu0 0.0
          %530 = vmatpush1.msra.mxu0 0.0
          %531 = vmatprep.subr.mxu0 0.0
          %532 = vmatpush1.msra.mxu0 0.0
          %533 = vmatprep.subr.mxu0 0.0
          %534 = vmatpush1.msra.mxu0 0.0
          %535 = vmatprep.subr.mxu0 0.0
          %536 = vmatpush1.msra.mxu0 0.0
          %537 = vmatprep.subr.mxu0 0.0
          %538 = vmatpush1.msra.mxu0 0.0
          %539 = vmatprep.subr.mxu0 0.0
          %540 = vmatpush1.msra.mxu0 0.0
          %541 = vmatprep.subr.mxu0 0.0
          %542 = vmatpush1.msra.mxu0 0.0
          %543 = vmatprep.subr.mxu0 0.0
          %544 = vmatpush1.msra.mxu0 0.0
          %545 = vmatprep.subr.mxu0 0.0
          %546 = vmatpush1.msra.mxu0 0.0
          %547 = vmatprep.subr.mxu0 0.0
          %548 = vmatpush1.msra.mxu0 0.0
          %549 = vmatprep.subr.mxu0 0.0
          %550 = vmatpush1.msra.mxu0 0.0
          %551 = vmatprep.subr.mxu0 0.0
          %552 = vmatpush1.msra.mxu0 0.0
          %553 = vmatprep.subr.mxu0 0.0
          %554 = vmatpush1.msra.mxu0 0.0
          %555 = vmatprep.subr.mxu0 0.0
          %556 = vmatpush1.msra.mxu0 0.0
          %557 = vmatprep.subr.mxu0 0.0
          %558 = vmatpush1.msra.mxu0 0.0
          %559 = vmatprep.subr.mxu0 0.0
          %560 = vmatpush1.msra.mxu0 0.0
          %561 = vmatprep.subr.mxu0 0.0
          %562 = vmatpush1.msra.mxu0 0.0
          %563 = vmatprep.subr.mxu0 0.0
          %564 = vmatpush1.msra.mxu0 0.0
          %565 = vmatprep.mubr.f32.mxu0 0.0
          %566 = vmatmul.mubr.f32.gmra.mrb[0].mxu0 %v499
          %v567 = vpop.f32.mrb[0].mxu0
          %v568 = vadd.f32 %v495, %v567
          %v569 = vpop.f32.mrb[0].mxu0
          %570 = vdwg.mxu0
          %v571 = vmax.f32 %v568, 0.0
          %v572 = vld [vmem:[%s3] sm:$0xf]
          %v573 = vld [vmem:[%s4] sm:$0x1]
          %v575 = vlaneseq
          %v576 = vshrl.u32 %v575, 7
          %v577 = vsub.s32 0, %v576
          %v578 = vrot.slane %v573, %v577
          %vm580 = vcmask 31744
          %v582 = vsel %vm580, %v571, 0
          %vm584 = vcmask 1043456
          %v586 = vsel %vm584, %v572, 0
          %588 = vmatprep.subr.mxu0 0.0
          %589 = vmatpush1.msra.mxu0 %v586
          %590 = vmatprep.subr.mxu0 0.0
          %591 = vmatpush1.msra.mxu0 0.0
          %592 = vmatprep.subr.mxu0 0.0
          %593 = vmatpush1.msra.mxu0 0.0
          %594 = vmatprep.subr.mxu0 0.0
          %595 = vmatpush1.msra.mxu0 0.0
          %596 = vmatprep.subr.mxu0 0.0
          %597 = vmatpush1.msra.mxu0 0.0
          %598 = vmatprep.subr.mxu0 0.0
          %599 = vmatpush1.msra.mxu0 0.0
          %600 = vmatprep.subr.mxu0 0.0
          %601 = vmatpush1.msra.mxu0 0.0
          %602 = vmatprep.subr.mxu0 0.0
          %603 = vmatpush1.msra.mxu0 0.0
          %604 = vmatprep.subr.mxu0 0.0
          %605 = vmatpush1.msra.mxu0 0.0
          %606 = vmatprep.subr.mxu0 0.0
          %607 = vmatpush1.msra.mxu0 0.0
          %608 = vmatprep.subr.mxu0 0.0
          %609 = vmatpush1.msra.mxu0 0.0
          %610 = vmatprep.subr.mxu0 0.0
          %611 = vmatpush1.msra.mxu0 0.0
          %612 = vmatprep.subr.mxu0 0.0
          %613 = vmatpush1.msra.mxu0 0.0
          %614 = vmatprep.subr.mxu0 0.0
          %615 = vmatpush1.msra.mxu0 0.0
          %616 = vmatprep.subr.mxu0 0.0
          %617 = vmatpush1.msra.mxu0 0.0
          %618 = vmatprep.subr.mxu0 0.0
          %619 = vmatpush1.msra.mxu0 0.0
          %620 = vmatprep.subr.mxu0 0.0
          %621 = vmatpush1.msra.mxu0 0.0
          %622 = vmatprep.subr.mxu0 0.0
          %623 = vmatpush1.msra.mxu0 0.0
          %624 = vmatprep.subr.mxu0 0.0
          %625 = vmatpush1.msra.mxu0 0.0
          %626 = vmatprep.subr.mxu0 0.0
          %627 = vmatpush1.msra.mxu0 0.0
          %628 = vmatprep.subr.mxu0 0.0
          %629 = vmatpush1.msra.mxu0 0.0
          %630 = vmatprep.subr.mxu0 0.0
          %631 = vmatpush1.msra.mxu0 0.0
          %632 = vmatprep.subr.mxu0 0.0
          %633 = vmatpush1.msra.mxu0 0.0
          %634 = vmatprep.subr.mxu0 0.0
          %635 = vmatpush1.msra.mxu0 0.0
          %636 = vmatprep.subr.mxu0 0.0
          %637 = vmatpush1.msra.mxu0 0.0
          %638 = vmatprep.subr.mxu0 0.0
          %639 = vmatpush1.msra.mxu0 0.0
          %640 = vmatprep.subr.mxu0 0.0
          %641 = vmatpush1.msra.mxu0 0.0
          %642 = vmatprep.subr.mxu0 0.0
          %643 = vmatpush1.msra.mxu0 0.0
          %644 = vmatprep.subr.mxu0 0.0
          %645 = vmatpush1.msra.mxu0 0.0
          %646 = vmatprep.subr.mxu0 0.0
          %647 = vmatpush1.msra.mxu0 0.0
          %648 = vmatprep.subr.mxu0 0.0
          %649 = vmatpush1.msra.mxu0 0.0
          %650 = vmatprep.subr.mxu0 0.0
          %651 = vmatpush1.msra.mxu0 0.0
          %652 = vmatprep.mubr.f32.mxu0 0.0
          %653 = vmatmul.mubr.f32.gmra.mrb[0].mxu0 %v582
          %v654 = vpop.f32.mrb[0].mxu0
          %v655 = vadd.f32 %v578, %v654
          %v656 = vpop.f32.mrb[0].mxu0
          %657 = vdwg.mxu0
          %v658 = vxor.u32 %v655, 2147483648
          %v659 = vmul.f32 %v658, 1.442695
          %v660 = vpow.pop %v659
          %v661 = vadd.f32 %v660, 1.0
          %v662 = vrcp.pop %v661
          %v663 = vmul.f32 1.0, %v662
          %664 = vst.msk [vmem:[#allocation4] sm:$0x3] %vm474, %v663
        $region86: #{senet_forward.1} parent=73 // pred_fallthru
          _
        // Predicated region
        $region87: #{senet_forward.1} parent=73 // pred_check
          %p665 = pneg %p140
        $region88: #{senet_forward.1} parent=73 // pred_check_branch
          %667 = sbr.rel (%p665) target = $region90
        $region89: #{senet_forward.1} parent=73 // pred_region
          %s669 = ssub.s32 32, 32
          %670 = vsyncadd [#allocation5], %s669
          %s672 = sshll.u32 [#allocation4], 4
          %s673 = int_to_ptr.vmem [resolvable:$true] %s672
          %675 = dma.vmem_to_hbm [thread:$0]  %s673, 32, %s5, [#allocation5]
        $region90: #{senet_forward.1} parent=73 // pred_fallthru
          _
        // Predicated region
        $region91: #{senet_forward.1} parent=73 // pred_check
          %p676 = pneg %p140
        $region92: #{senet_forward.1} parent=73 // pred_check_branch
          %678 = sbr.rel (%p676) target = $region94
        $region93: #{senet_forward.1} parent=73 // pred_region
          %679 = dma.done [#allocation5], 32
        $region94: #{senet_forward.1} parent=73 // pred_fallthru
          _
      $region74: #{senet_forward.1} parent=5 // pred_fallthru
        _
      %p680 = scmp.le.s32.totalorder 2, %s12
      // Predicated region
      $region95: #{senet_forward.1} parent=5 // pred_check
        %p681 = pneg %p680
      $region96: #{senet_forward.1} parent=5 // pred_check_branch
        %683 = sbr.rel (%p681) target = $region98
      $region97: #{senet_forward.1} parent=5 // pred_region
        %s684 = ssub.s32 %s12, 2
      $region98: #{senet_forward.1} parent=5 // pred_fallthru
        _
    $region6: #{senet_forward.1} parent=1 // loop_footer
      %s16 = sadd.s32 1, %s12
    $region7: #{senet_forward.1} parent=1 // loop_footer_branch
      %11 = sbr.rel target = $region3
    $region8: #{senet_forward.1} parent=1 // loop_exit
      _
    %685 = vsyncpa [#allocation5], 1
    %s686 = scalar_lea.sflag [#allocation5], 1
    %687 = vsyncpa %s686, 1

</llo_original>
